<compile_context>
chip_gen: v6e
topology: v6e:2x2x1
jax: 0.10.0
libtpu: 0.0.40
codegen_flags: <defaults>
</compile_context>

<pallas_src>
import functools

import jax
import jax.numpy as jnp
import numpy as np
from jax.experimental import pallas as pl
from jax.experimental.pallas import tpu as pltpu


# ---------------------------------------------------------------------------
# Linear:  y = x @ w (+ bias), weight resident in VMEM, grid streams M only
# ---------------------------------------------------------------------------
def _linear_kernel(x_ref, w_ref, *rest, has_bias):
    if has_bias:
        b_ref, o_ref = rest
    else:
        (o_ref,) = rest
    acc = jnp.dot(x_ref[...], w_ref[...], preferred_element_type=jnp.float32)
    if has_bias:
        acc = acc + b_ref[...].astype(jnp.float32)
    o_ref[...] = acc.astype(o_ref.dtype)


def pallas_linear(x2d, w, bias=None, *, tm=256):
    """y = x2d @ w (+ bias).

    The whole (K, N) weight block stays resident in VMEM (a few MB even at
    production dim=768 / 3*dim=2304) and the grid streams M tiles only, so
    there is no K reduction axis and no accumulator scratch.  M does not have
    to divide the tile (pl.cdiv grid; the last block is clipped).
    """
    M, K = x2d.shape
    K2, N = w.shape
    assert K == K2
    bm = M if M <= tm else tm            # tm is a multiple of 8; full-M blocks only for small M
    grid = (pl.cdiv(M, bm),)

    in_specs = [
        pl.BlockSpec((bm, K), lambda i: (i, 0)),
        pl.BlockSpec((K, N), lambda i: (0, 0)),     # resident weight
    ]
    args = [x2d, w]
    if bias is not None:
        in_specs.append(pl.BlockSpec((1, N), lambda i: (0, 0)))
        args.append(bias.reshape(1, N))

    kernel = functools.partial(_linear_kernel, has_bias=bias is not None)
    # TODO(synk): add N/K tiling (with masked edge tiles) for weights that do
    #             not fit VMEM; not needed at BridgeFormer sizes.
    return pl.pallas_call(
        kernel,
        out_shape=jax.ShapeDtypeStruct((M, N), x2d.dtype),
        grid=grid,
        in_specs=in_specs,
        out_specs=pl.BlockSpec((bm, N), lambda i: (i, 0)),
        compiler_params=pltpu.CompilerParams(
            dimension_semantics=("parallel",),
            vmem_limit_bytes=40 * 1024 * 1024,
        ),
    )(*args)


# ---------------------------------------------------------------------------
# Fused VarAttention kernel: cls attention + per-frame spatial attention
# ---------------------------------------------------------------------------
def _softmax_last(s):
    # f32 softmax; the divide uses the EUP approximate reciprocal (vrcp).
    # This is a deliberate numerics deviation from jax.nn.softmax (documented),
    # well inside the 5e-3 test tolerance.
    s = s - jnp.max(s, axis=-1, keepdims=True)
    e = jnp.exp(s)
    return e * pl.reciprocal(jnp.sum(e, axis=-1, keepdims=True), approx=True)


def _make_fused_attn_kernel(n, dim, h, f, p, masked):
    hd = dim // h

    def to_heads(x2d):
        # (r, dim) -> (h, r, hd): sub-vreg lane slices of an already-loaded
        # value, stacked along a new major axis (no extra VMEM loads).
        return jnp.stack([x2d[:, i * hd:(i + 1) * hd] for i in range(h)], axis=0)

    def from_heads(x3d):
        # (h, r, hd) -> (r, h*hd): assemble a lane-dense row block so the
        # output store is one full-width vst instead of h masked column writes.
        return jnp.concatenate([x3d[i] for i in range(h)], axis=-1)

    # TODO(synk): for very large n*dim (f32) add a grid axis over head groups
    #             to shrink the resident qkv block below v7x's 64 MiB VMEM.
    # TODO(synk): reorder tokens to [patches..., cls-last] (or pad p to a
    #             multiple of 8) so per-frame row offsets are sublane-aligned.
    def kernel(*refs):
        if masked:
            qkv_ref, mask_ref, o_ref = refs
        else:
            qkv_ref, o_ref = refs
        ff = pl.program_id(1)

        if masked:
            m = mask_ref[0].astype(jnp.float32)              # (1, 1+p)
            sp_bias = (1.0 - m) * (-10000.0)                 # (1, 1+p)

        # ---- cls-token attention over the full sequence, all heads at once,
        #      executed only at the first frame step of each batch element ----
        @pl.when(ff == 0)
        def _():
            q_c = to_heads(qkv_ref[0, 0:1, 0:dim])                 # (h, 1, hd)  scale pre-folded
            k_a = to_heads(qkv_ref[0, :, dim:2 * dim])             # (h, n, hd)
            v_a = to_heads(qkv_ref[0, :, 2 * dim:3 * dim])         # (h, n, hd)
            sim = jnp.einsum("hqd,hkd->hqk", q_c, k_a,
                             preferred_element_type=jnp.float32)   # (h, 1, n)
            if masked:
                cls_mask = jnp.concatenate([m[:, 0:1]] + [m[:, 1:]] * f, axis=1)  # (1, n)
                sim = sim + (1.0 - cls_mask) * (-10000.0)
            a = _softmax_last(sim)
            cls_o = jnp.einsum("hqk,hkd->hqd", a.astype(v_a.dtype), v_a,
                               preferred_element_type=jnp.float32)  # (h, 1, hd)
            o_ref[0, 0:1, :] = from_heads(cls_o).astype(o_ref.dtype)  # lane-dense (1, dim)

        # ---- per-frame spatial attention, all heads batched ----------------
        lo = 1 + ff * p
        rows = pl.ds(lo, p)
        q_f = to_heads(qkv_ref[0, rows, 0:dim])                     # (h, p, hd)
        k_f = to_heads(qkv_ref[0, rows, dim:2 * dim])               # (h, p, hd)
        v_f = to_heads(qkv_ref[0, rows, 2 * dim:3 * dim])           # (h, p, hd)
        k_c = to_heads(qkv_ref[0, 0:1, dim:2 * dim])                # (h, 1, hd)
        v_c = to_heads(qkv_ref[0, 0:1, 2 * dim:3 * dim])            # (h, 1, hd)

        # keys = [cls, frame patches]: concatenate the *scores* in f32 instead
        # of concatenating K/V rows.  The cls column is a VPU mul + lane
        # reduce (no 1-wide MXU pushes).
        sim_c = jnp.sum(q_f.astype(jnp.float32) * k_c.astype(jnp.float32),
                        axis=-1, keepdims=True)                     # (h, p, 1)
        sim_p = jnp.einsum("hqd,hkd->hqk", q_f, k_f,
                           preferred_element_type=jnp.float32)      # (h, p, p)
        sim = jnp.concatenate([sim_c, sim_p], axis=-1)              # (h, p, 1+p)
        if masked:
            sim = sim + sp_bias                                     # broadcast over (h, p)
        a = _softmax_last(sim)                                      # (h, p, 1+p) f32
        out = jnp.einsum("hqk,hkd->hqd", a[:, :, 1:].astype(v_f.dtype), v_f,
                         preferred_element_type=jnp.float32)        # (h, p, hd)
        out = out + a[:, :, 0:1] * v_c.astype(jnp.float32)          # cls-value column
        o_ref[0, rows, :] = from_heads(out).astype(o_ref.dtype)     # lane-dense (p, dim)

    return kernel


def fused_var_attention(qkv, mask, whether, f, num_heads):
    """qkv (b, n, 3*dim) packed projection, mask (b, 1+p) -> (b, n, dim)."""
    b, n, three_dim = qkv.shape
    dim = three_dim // 3
    n_f = int(f)
    p = (n - 1) // n_f
    masked = bool(whether)                      # module: `if whether is not True`
    kernel = _make_fused_attn_kernel(n, dim, num_heads, n_f, p, masked)

    in_specs = [pl.BlockSpec((1, n, three_dim), lambda bb, ff: (bb, 0, 0))]
    args = [qkv]
    if masked:
        in_specs.append(pl.BlockSpec((1, 1, 1 + p), lambda bb, ff: (bb, 0, 0)))
        args.append(mask.astype(jnp.float32).reshape(b, 1, 1 + p))

    return pl.pallas_call(
        kernel,
        out_shape=jax.ShapeDtypeStruct((b, n, dim), qkv.dtype),
        grid=(b, n_f),
        in_specs=in_specs,
        out_specs=pl.BlockSpec((1, n, dim), lambda bb, ff: (bb, 0, 0)),
        compiler_params=pltpu.CompilerParams(
            dimension_semantics=("parallel", "arbitrary"),
            vmem_limit_bytes=40 * 1024 * 1024,
        ),
    )(*args)


# ---------------------------------------------------------------------------
# VarAttention forward (Pallas) and pure-JAX reference
# ---------------------------------------------------------------------------
def prepare_var_attention_params(params, dim, num_heads):
    """One-time host transform: fold the attention scale into the Q columns of
    w_qkv (qkv_bias=False, so scaling the weight is mathematically exact)."""
    hd = dim // num_heads
    scale = hd ** (-0.5)
    w_qkv = params["w_qkv"].at[:, :dim].multiply(scale)
    return {"w_qkv": w_qkv, "w_proj": params["w_proj"], "b_proj": params["b_proj"]}


def var_attention_forward(x, mask, whether, f, prepared_params, num_heads):
    b, n, dim = x.shape

    # QKV projection (qkv_bias=False -> no bias input at all; scale pre-folded)
    qkv = pallas_linear(x.reshape(b * n, dim), prepared_params["w_qkv"], bias=None)
    qkv = qkv.reshape(b, n, 3 * dim)

    out = fused_var_attention(qkv, mask, whether, f, num_heads)

    # output projection (proj_drop has p=0 -> identity)
    y = pallas_linear(out.reshape(b * n, dim),
                      prepared_params["w_proj"], prepared_params["b_proj"])
    return y.reshape(b, n, dim)


def var_attention_reference(x, mask, whether, f, params, num_heads):
    """Pure-JAX mirror of the PyTorch module (for correctness checking)."""
    b, n, dim = x.shape
    h = num_heads
    hd = dim // h
    scale = hd ** (-0.5)

    def attention(q, k, v, m=None):
        sim = jnp.einsum("bid,bjd->bij", q, k)
        if m is not None:
            sim = sim + ((1.0 - m) * -10000.0)[:, None, :]
        a = jax.nn.softmax(sim, axis=-1)
        return jnp.einsum("bij,bjd->bid", a, v)

    qkv = (x.reshape(b * n, dim) @ params["w_qkv"]).reshape(b, n, 3 * dim)
    q, k, v = jnp.split(qkv, 3, axis=-1)

    def to_heads(t):
        return t.reshape(b, n, h, hd).transpose(0, 2, 1, 3).reshape(b * h, n, hd)

    q, k, v = map(to_heads, (q, k, v))
    q = q * scale

    mask_h = jnp.repeat(mask, h, axis=0)
    BH = b * h
    n_f = int(f)
    p = (n - 1) // n_f

    cls_q, q_ = q[:, 0:1], q[:, 1:]
    cls_k, k_ = k[:, 0:1], k[:, 1:]
    cls_v, v_ = v[:, 0:1], v[:, 1:]

    if whether is True:
        mask_tile = jnp.concatenate(
            [mask_h[:, 0:1], jnp.tile(mask_h[:, 1:], (1, n_f))], axis=1)
        cls_out = attention(cls_q, k, v, mask_tile)
    else:
        cls_out = attention(cls_q, k, v)

    def split_frames(t):
        return t.reshape(BH, n_f, p, hd).reshape(BH * n_f, p, hd)

    q_, k_, v_ = map(split_frames, (q_, k_, v_))
    r = q_.shape[0] // cls_k.shape[0]
    cls_k_r = jnp.repeat(cls_k, r, axis=0)
    cls_v_r = jnp.repeat(cls_v, r, axis=0)
    k_full = jnp.concatenate([cls_k_r, k_], axis=1)
    v_full = jnp.concatenate([cls_v_r, v_], axis=1)

    if whether is True:
        mask_tile2 = jnp.repeat(mask_h, n_f, axis=0)
        out = attention(q_, k_full, v_full, mask_tile2)
    else:
        out = attention(q_, k_full, v_full)

    out = out.reshape(BH, n_f * p, hd)
    out = jnp.concatenate([cls_out, out], axis=1)
    out = out.reshape(b, h, n, hd).transpose(0, 2, 1, 3).reshape(b, n, dim)
    y = out.reshape(b * n, dim) @ params["w_proj"] + params["b_proj"][None, :]
    return y.reshape(b, n, dim)


# ---------------------------------------------------------------------------
if __name__ == "__main__":
    # small, module-consistent shapes
    b, dim, num_heads = 2, 32, 4
    f, p = 2, 4                   # frames, patches per frame
    n = 1 + f * p                 # tokens: [cls] + f*p patches

    key = jax.random.PRNGKey(0)
    kx, km, kw1, kw2, kb = jax.random.split(key, 5)

    x = jax.random.normal(kx, (b, n, dim), dtype=jnp.float32)
    mask = (jax.random.uniform(km, (b, 1 + p)) > 0.3).astype(jnp.float32)
    mask = mask.at[:, 0].set(1.0)  # cls token always visible

    params = {
        # stored pre-transposed: y = x @ w  (PyTorch does x @ W^T)
        "w_qkv": 0.02 * jax.random.normal(kw1, (dim, 3 * dim), dtype=jnp.float32),
        "w_proj": 0.02 * jax.random.normal(kw2, (dim, dim), dtype=jnp.float32),
        "b_proj": 0.02 * jax.random.normal(kb, (dim,), dtype=jnp.float32),
    }
    prepared = prepare_var_attention_params(params, dim, num_heads)

    # f32 correctness check against the pure-JAX reference (both branches)
    for whether in (True, False):
        y_pl = jax.block_until_ready(
            var_attention_forward(x, mask, whether, f, prepared, num_heads))
        y_ref = jax.block_until_ready(
            var_attention_reference(x, mask, whether, f, params, num_heads))
        np.testing.assert_allclose(np.asarray(y_pl), np.asarray(y_ref),
                                   rtol=5e-3, atol=5e-3)
        assert y_pl.shape == (b, n, dim)

    # bf16 smoke test: bf16 operands into the MXU, f32 accumulation,
    # f32 mask/softmax math.
    xb = x.astype(jnp.bfloat16)
    params_b = {name: val.astype(jnp.bfloat16) for name, val in params.items()}
    prepared_b = prepare_var_attention_params(params_b, dim, num_heads)
    yb = jax.block_until_ready(
        var_attention_forward(xb, mask, True, f, prepared_b, num_heads))
    assert yb.shape == (b, n, dim)
    assert bool(jnp.all(jnp.isfinite(yb.astype(jnp.float32))))

    print("KERNEL_OK")
</pallas_src>

<mosaic_0001>
module attributes {stable_mosaic.version = 11 : i64} {
  func.func @_linear_kernel(%arg0: i32, %arg1: memref<18x32xf32, #tpu.memory_space<vmem>>, %arg2: memref<32x96xf32, #tpu.memory_space<vmem>>, %arg3: memref<18x96xf32, #tpu.memory_space<vmem>>) attributes {dimension_semantics = [#tpu.dimension_semantics<parallel>], iteration_bounds = array<i64: 1>, scalar_prefetch = 0 : i64, scratch_operands = 0 : i64, tpu.core_type = #tpu.core_type<tc>, window_params = [{transform_indices = @transform_0, window_bounds = array<i64: 18, 32>}, {pipeline_mode = #tpu.pipeline_mode<synchronous>, transform_indices = @transform_1, window_bounds = array<i64: 32, 96>}, {transform_indices = @transform_2, window_bounds = array<i64: 18, 96>}]} {
    %c0 = arith.constant 0 : index
    %c0_0 = arith.constant 0 : index
    %0 = vector.load %arg1[%c0, %c0_0] : memref<18x32xf32, #tpu.memory_space<vmem>>, vector<18x32xf32>
    %c0_1 = arith.constant 0 : index
    %c0_2 = arith.constant 0 : index
    %1 = vector.load %arg2[%c0_1, %c0_2] : memref<32x96xf32, #tpu.memory_space<vmem>>, vector<32x96xf32>
    %cst = arith.constant dense<0.000000e+00> : vector<18x96xf32>
    %2 = tpu.matmul %0, %1, %cst {dimension_numbers = #tpu.dot_dimension_numbers<[1], [0], [0], [1], [0, 0, 1, 1], [], []>} : vector<18x32xf32>, vector<32x96xf32>, vector<18x96xf32> -> vector<18x96xf32>
    %c0_3 = arith.constant 0 : index
    %c0_4 = arith.constant 0 : index
    %3 = vector.load %arg3[%c0_3, %c0_4] : memref<18x96xf32, #tpu.memory_space<vmem>>, vector<18x96xf32>
    tpu.vector_store %arg3[%c0_3, %c0_4], %2 {strides = array<i32>} : memref<18x96xf32, #tpu.memory_space<vmem>>, vector<18x96xf32>,
    return
  }
  func.func @transform_0(%arg0: i32) -> (i32, i32) {
    %c0_i32 = arith.constant 0 : i32
    %c0_i32_0 = arith.constant 0 : i32
    return %arg0, %c0_i32 : i32, i32
  }
  func.func @transform_1(%arg0: i32) -> (i32, i32) {
    %c0_i32 = arith.constant 0 : i32
    %c0_i32_0 = arith.constant 0 : i32
    %c0_i32_1 = arith.constant 0 : i32
    return %c0_i32, %c0_i32_0 : i32, i32
  }
  func.func @transform_2(%arg0: i32) -> (i32, i32) {
    %c0_i32 = arith.constant 0 : i32
    %c0_i32_0 = arith.constant 0 : i32
    return %arg0, %c0_i32 : i32, i32
  }
}

</mosaic_0001>

<llo_original>
// kernel: tpu_custom_call.1
$region0: #{tpu_custom_call.1}
  #allocation0 [shape = 'u32[]', space=smem, size = 0x4, offset = 0x4, fixed_abs, tag = 'smem constant byte address 0x4 - core index']
  #allocation1 [shape = 'u32[144,128]{1,0:T(1,128)}', space=vmem, size = 0x12000, scoped, tag = 'internal scratch']
  %s0 = inlined_call_operand.hbm [shape: f32[18,32], index: 0, kind: input, shape index: {}]
  %s1 = inlined_call_operand.hbm [shape: f32[32,96], index: 1, kind: input, shape index: {}]
  %s2 = inlined_call_operand.hbm [shape: f32[18,96], index: 2, kind: output, shape index: {}]
  %s3 = sld [smem:[#allocation0]]
  $region26: #{tpu_custom_call.1} parent=0
    _
  %s5 = ssub.s32 1, %s3
  %s6 = scalar_select 0, %s5, %s3
  $region1: #{tpu_custom_call.1} parent=0
    #allocation2 [shape = 'u8[12288]{0}', space=vmem, size = 0x3000, scoped, tag = 'input window, operand 0, single buffered']
    #allocation3 [shape = 's32[1]{0}', space=sflag, size = 0x4, scoped, tag = 'scoped memory for tpu_custom_call.1']
    #allocation4 [shape = 's32[1]{0}', space=sflag, size = 0x4, scoped, tag = 'scoped memory for tpu_custom_call.1']
    #allocation5 [shape = 'u8[16384]{0}', space=vmem, size = 0x4000, scoped, tag = 'input window, operand 1, single buffered']
    #allocation6 [shape = 's32[1]{0}', space=sflag, size = 0x4, scoped, tag = 'scoped memory for tpu_custom_call.1']
    #allocation7 [shape = 'u8[12288]{0}', space=vmem, size = 0x3000, scoped, tag = 'output window, operand 0, single buffered']
    %7 = vsyncpa [#allocation3], 0
    %8 = vsyncpa [#allocation6], 0
    %9 = vsyncpa [#allocation4], 0
    // Predicated region
    $region2: #{tpu_custom_call.1} parent=1 // pred_check
      _
    $region3: #{tpu_custom_call.1} parent=1 // pred_check_branch
      %11 = sbr.rel (0) target = $region5
    $region4: #{tpu_custom_call.1} parent=1 // pred_region
      %s13 = ssub.s32 384, 384
      %14 = vsyncadd [#allocation3], %s13
      %s15 = sshll.u32 [#allocation2], 4
      %s16 = int_to_ptr.vmem [resolvable:$true] %s15
      %21 = dma.hbm_to_vmem [thread:$0]  %s0, 384, %s16, [#allocation3], 128, 128, 8
    $region5: #{tpu_custom_call.1} parent=1 // pred_fallthru
      _
    // Predicated region
    $region6: #{tpu_custom_call.1} parent=1 // pred_check
      _
    $region7: #{tpu_custom_call.1} parent=1 // pred_check_branch
      %23 = sbr.rel (0) target = $region9
    $region8: #{tpu_custom_call.1} parent=1 // pred_region
      %s25 = ssub.s32 512, 512
      %26 = vsyncadd [#allocation6], %s25
      %s27 = sshll.u32 [#allocation5], 4
      %s28 = int_to_ptr.vmem [resolvable:$true] %s27
      %33 = dma.hbm_to_vmem [thread:$0]  %s1, 512, %s28, [#allocation6], 128, 128, 8
    $region9: #{tpu_custom_call.1} parent=1 // pred_fallthru
      _
    // Predicated region
    $region10: #{tpu_custom_call.1} parent=1 // pred_check
      _
    $region11: #{tpu_custom_call.1} parent=1 // pred_check_branch
      %35 = sbr.rel (0) target = $region13
    $region12: #{tpu_custom_call.1} parent=1 // pred_region
      %36 = dma.done [#allocation3], 384
    $region13: #{tpu_custom_call.1} parent=1 // pred_fallthru
      _
    // Predicated region
    $region14: #{tpu_custom_call.1} parent=1 // pred_check
      _
    $region15: #{tpu_custom_call.1} parent=1 // pred_check_branch
      %38 = sbr.rel (0) target = $region17
    $region16: #{tpu_custom_call.1} parent=1 // pred_region
      %39 = dma.done [#allocation6], 512
    $region17: #{tpu_custom_call.1} parent=1 // pred_fallthru
      _
    %v40 = vld [vmem:[#allocation2] sm:$0xff]
    %v41 = vld [vmem:[#allocation2 + $0x8] sm:$0xff]
    %v42 = vld [vmem:[#allocation2 + $0x10] sm:$0x3]
    %v43 = vld [vmem:[#allocation5] sm:$0xff]
    %v44 = vld [vmem:[#allocation5 + $0x8] sm:$0xff]
    %v45 = vld [vmem:[#allocation5 + $0x10] sm:$0xff]
    %v46 = vld [vmem:[#allocation5 + $0x18] sm:$0xff]
    %vm47 = vcmask 261120
    %v49 = vsel %vm47, %v40, 0
    %v52 = vsel %vm47, %v41, 0
    %v55 = vsel %vm47, %v42, 0
    %57 = vmatprep.subr.mxu0 0.0
    %58 = vmatpush1.msra.mxu0 0.0
    %59 = vmatprep.subr.mxu0 0.0
    %60 = vmatpush1.msra.mxu0 0.0
    %61 = vmatprep.subr.mxu0 0.0
    %62 = vmatpush1.msra.mxu0 0.0
    %63 = vmatprep.subr.mxu0 0.0
    %64 = vmatpush1.msra.mxu0 0.0
    %65 = vmatprep.subr.mxu0 0.0
    %66 = vmatpush1.msra.mxu0 0.0
    %67 = vmatprep.subr.mxu0 0.0
    %68 = vmatpush1.msra.mxu0 0.0
    %69 = vmatprep.subr.mxu0 0.0
    %70 = vmatpush1.msra.mxu0 0.0
    %71 = vmatprep.subr.mxu0 0.0
    %72 = vmatpush1.msra.mxu0 0.0
    %73 = vmatprep.subr.mxu0 0.0
    %74 = vmatpush1.msra.mxu0 0.0
    %75 = vmatprep.subr.mxu0 0.0
    %76 = vmatpush1.msra.mxu0 0.0
    %77 = vmatprep.subr.mxu0 0.0
    %78 = vmatpush1.msra.mxu0 0.0
    %79 = vmatprep.subr.mxu0 0.0
    %80 = vmatpush1.msra.mxu0 0.0
    %81 = vmatprep.subr.mxu0 0.0
    %82 = vmatpush1.msra.mxu0 %v46
    %83 = vmatprep.subr.mxu0 0.0
    %84 = vmatpush1.msra.mxu0 %v45
    %85 = vmatprep.subr.mxu0 0.0
    %86 = vmatpush1.msra.mxu0 %v44
    %87 = vmatprep.subr.mxu0 0.0
    %88 = vmatpush1.msra.mxu0 %v43
    %89 = vmatprep.subr.mxu0 0.0
    %90 = vmatpush2.msra.mxu0 0.0
    %91 = vmatprep.subr.mxu0 0.0
    %92 = vmatpush2.msra.mxu0 0.0
    %93 = vmatprep.subr.mxu0 0.0
    %94 = vmatpush2.msra.mxu0 0.0
    %95 = vmatprep.subr.mxu0 0.0
    %96 = vmatpush2.msra.mxu0 0.0
    %97 = vmatprep.subr.mxu0 0.0
    %98 = vmatpush2.msra.mxu0 0.0
    %99 = vmatprep.subr.mxu0 0.0
    %100 = vmatpush2.msra.mxu0 0.0
    %101 = vmatprep.subr.mxu0 0.0
    %102 = vmatpush2.msra.mxu0 0.0
    %103 = vmatprep.subr.mxu0 0.0
    %104 = vmatpush2.msra.mxu0 0.0
    %105 = vmatprep.subr.mxu0 0.0
    %106 = vmatpush2.msra.mxu0 0.0
    %107 = vmatprep.subr.mxu0 0.0
    %108 = vmatpush2.msra.mxu0 0.0
    %109 = vmatprep.subr.mxu0 0.0
    %110 = vmatpush2.msra.mxu0 0.0
    %111 = vmatprep.subr.mxu0 0.0
    %112 = vmatpush2.msra.mxu0 0.0
    %113 = vmatprep.subr.mxu0 0.0
    %114 = vmatpush2.msra.mxu0 0.0
    %115 = vmatprep.subr.mxu0 0.0
    %116 = vmatpush2.msra.mxu0 0.0
    %117 = vmatprep.subr.mxu0 0.0
    %118 = vmatpush2.msra.mxu0 0.0
    %119 = vmatprep.subr.mxu0 0.0
    %120 = vmatpush2.msra.mxu0 0.0
    %121 = vmatprep.mubr.f32.mxu0 0.0
    %122 = vmatmul.mubr.f32.gmra.mxu0 %v49
    %v123 = vpop.f32.mrf.mxu0
    %v124 = vadd.f32 0.0, %v123
    %v125 = vpop.f32.mrf.mxu0
    %126 = vmatprep.mubr.f32.mxu0 0.0
    %127 = vmatmul.mubr.f32.gmra.mxu0 %v52
    %v128 = vpop.f32.mrf.mxu0
    %v129 = vadd.f32 0.0, %v128
    %v130 = vpop.f32.mrf.mxu0
    %131 = vmatprep.mubr.f32.mxu0 0.0
    %132 = vmatmul.mubr.f32.gmra.mxu0 %v55
    %v133 = vpop.f32.mrf.mxu0
    %v134 = vadd.f32 0.0, %v133
    %v135 = vpop.f32.mrf.mxu0
    %136 = vdwg.mxu0
    %vm137 = vcmask 785408
    %138 = vst.msk [vmem:[#allocation7] sm:$0xff] %vm137, %v124
    %139 = vst.msk [vmem:[#allocation7 + $0x8] sm:$0xff] %vm137, %v129
    %vm140 = vcmask 779264
    %141 = vst.msk [vmem:[#allocation7 + $0x10] sm:$0x3] %vm140, %v134
    // Predicated region
    $region18: #{tpu_custom_call.1} parent=1 // pred_check
      _
    $region19: #{tpu_custom_call.1} parent=1 // pred_check_branch
      %143 = sbr.rel (0) target = $region21
    $region20: #{tpu_custom_call.1} parent=1 // pred_region
      %s145 = ssub.s32 384, 384
      %146 = vsyncadd [#allocation4], %s145
      %s147 = sshll.u32 [#allocation7], 4
      %s148 = int_to_ptr.vmem [resolvable:$true] %s147
      %153 = dma.vmem_to_hbm [thread:$0]  %s148, 384, %s2, [#allocation4], 128, 128, 8
    $region21: #{tpu_custom_call.1} parent=1 // pred_fallthru
      _
    // Predicated region
    $region22: #{tpu_custom_call.1} parent=1 // pred_check
      _
    $region23: #{tpu_custom_call.1} parent=1 // pred_check_branch
      %155 = sbr.rel (0) target = $region25
    $region24: #{tpu_custom_call.1} parent=1 // pred_region
      %156 = dma.done [#allocation4], 384
    $region25: #{tpu_custom_call.1} parent=1 // pred_fallthru
      _
    %157 = vsyncpa [#allocation3], 1
    %158 = vsyncpa [#allocation6], 1
    %159 = vsyncpa [#allocation4], 1

</llo_original>
